<compile_context>
chip_gen: v5e
topology: v5e:2x2
jax: 0.10.0
libtpu: 0.0.40
codegen_flags: <defaults>
</compile_context>

<pallas_src>
import functools
import math

import jax
import jax.numpy as jnp
from jax import lax
from jax.experimental import pallas as pl
from jax.experimental.pallas import tpu as pltpu

_NEG_BIG = -1e30           # bias value for padded vocab columns (exp underflows to 0)
_VMEM_LIMIT = 48 * 1024 * 1024


def _round_up(x, m):
    return (x + m - 1) // m * m


def _lse_kernel(x_ref, w_ref, b_ref, lse_ref, m_sc, l_sc):
    """Pass 1: per-row logsumexp of (x @ W^T + b), online over the vocab tiles."""
    v = pl.program_id(1)

    @pl.when(v == 0)
    def _():
        m_sc[...] = jnp.full_like(m_sc, -jnp.inf)
        l_sc[...] = jnp.zeros_like(l_sc)

    # x_ref: [TM, H], w_ref: [TV, H] (native nn.Linear layout, contract on H).
    logits = lax.dot_general(
        x_ref[...], w_ref[...],
        dimension_numbers=(((1,), (1,)), ((), ())),
        preferred_element_type=jnp.float32,
    ) + b_ref[...]

    m_prev = m_sc[...]
    m_new = jnp.maximum(m_prev, jnp.max(logits, axis=-1, keepdims=True))
    alpha = jnp.exp(m_prev - m_new)
    l_sc[...] = alpha * l_sc[...] + jnp.sum(jnp.exp(logits - m_new),
                                            axis=-1, keepdims=True)
    m_sc[...] = m_new

    @pl.when(v == pl.num_programs(1) - 1)
    def _():
        lse_ref[...] = m_sc[...] + jnp.log(l_sc[...])


def _logprob_kernel(x_ref, w_ref, b_ref, lse_ref, o_ref):
    """Pass 2: recompute the logits tile and emit logits - lse as a [TM, TV] tile."""
    logits = lax.dot_general(
        x_ref[...], w_ref[...],
        dimension_numbers=(((1,), (1,)), ((), ())),
        preferred_element_type=jnp.float32,
    ) + b_ref[...]
    o_ref[...] = (logits - lse_ref[...]).astype(o_ref.dtype)


@functools.partial(jax.jit, static_argnames=("tm", "tv"))
def masked_category_forward(x, weight, bias, *, tm=128, tv=512):
    """log_softmax(x @ weight.T + bias, axis=-1).

    x:      [..., H]   (e.g. [B, S, H])
    weight: [V, H]     (PyTorch nn.Linear convention, used as-is, no transpose)
    bias:   [V]
    returns [..., V]
    """
    *lead, hidden = x.shape
    vocab = weight.shape[0]
    m_total = math.prod(lead) if lead else 1

    # --- tiling / padding (all static) -------------------------------------
    tm = min(tm, _round_up(m_total, 8))
    m_pad = _round_up(m_total, tm)
    tv = min(tv, _round_up(vocab, 128))
    v_pad = _round_up(vocab, tv)

    x2d = x.reshape(m_total, hidden)
    if m_pad != m_total:
        x2d = jnp.pad(x2d, ((0, m_pad - m_total), (0, 0)))

    bias_f32 = bias.astype(jnp.float32)
    if v_pad != vocab:
        weight_p = jnp.pad(weight, ((0, v_pad - vocab), (0, 0)))
        bias_p = jnp.pad(bias_f32, ((0, v_pad - vocab),), constant_values=_NEG_BIG)
    else:
        weight_p = weight
        bias_p = bias_f32
    bias2d = bias_p.reshape(1, v_pad)

    grid = (m_pad // tm, v_pad // tv)
    cparams = pltpu.CompilerParams(
        dimension_semantics=("parallel", "arbitrary"),
        vmem_limit_bytes=_VMEM_LIMIT,
    )

    # --- pass 1: per-row logsumexp -----------------------------------------
    lse = pl.pallas_call(
        _lse_kernel,
        out_shape=jax.ShapeDtypeStruct((m_pad, 1), jnp.float32),
        grid_spec=pltpu.PrefetchScalarGridSpec(
            num_scalar_prefetch=0,
            grid=grid,
            in_specs=[
                pl.BlockSpec((tm, hidden), lambda i, v: (i, 0)),
                pl.BlockSpec((tv, hidden), lambda i, v: (v, 0)),
                pl.BlockSpec((1, tv), lambda i, v: (0, v)),
            ],
            out_specs=pl.BlockSpec((tm, 1), lambda i, v: (i, 0)),
            scratch_shapes=[
                pltpu.VMEM((tm, 1), jnp.float32),
                pltpu.VMEM((tm, 1), jnp.float32),
            ],
        ),
        compiler_params=cparams,
    )(x2d, weight_p, bias2d)

    # --- pass 2: write log-probabilities tile by tile ------------------------
    out2d = pl.pallas_call(
        _logprob_kernel,
        out_shape=jax.ShapeDtypeStruct((m_pad, v_pad), x.dtype),
        grid_spec=pltpu.PrefetchScalarGridSpec(
            num_scalar_prefetch=0,
            grid=grid,
            in_specs=[
                pl.BlockSpec((tm, hidden), lambda i, v: (i, 0)),
                pl.BlockSpec((tv, hidden), lambda i, v: (v, 0)),
                pl.BlockSpec((1, tv), lambda i, v: (0, v)),
                pl.BlockSpec((tm, 1), lambda i, v: (i, 0)),
            ],
            out_specs=pl.BlockSpec((tm, tv), lambda i, v: (i, v)),
        ),
        compiler_params=cparams,
    )(x2d, weight_p, bias2d, lse)

    out2d = out2d[:m_total, :vocab]
    return out2d.reshape(*lead, vocab)


def init_params(key, hidden, vocab_size, dtype=jnp.float32):
    """Deterministic init mimicking nn.Linear default (uniform +/- 1/sqrt(hidden))."""
    kw, kb = jax.random.split(key)
    bound = 1.0 / (hidden ** 0.5)
    weight = jax.random.uniform(kw, (vocab_size, hidden), dtype, -bound, bound)
    bias = jax.random.uniform(kb, (vocab_size,), dtype, -bound, bound)
    return weight, bias


if __name__ == "__main__":
    key = jax.random.PRNGKey(0)

    # Case 1: nicely aligned small shapes.
    B, S, H, V = 2, 8, 32, 128
    kx, kp, key = jax.random.split(key, 3)
    x = jax.random.normal(kx, (B, S, H), jnp.float32)
    weight, bias = init_params(kp, H, V)
    out = masked_category_forward(x, weight, bias)
    jax.block_until_ready(out)
    ref = jax.nn.log_softmax(x @ weight.T + bias, axis=-1)
    assert out.shape == (B, S, V)
    assert jnp.allclose(out, ref, atol=1e-4, rtol=1e-4)

    # Case 2: ragged shapes to exercise the M / V padding and masked-vocab path.
    B2, S2, H2, V2 = 3, 5, 48, 200
    kx2, kp2, key = jax.random.split(key, 3)
    x2 = jax.random.normal(kx2, (B2, S2, H2), jnp.float32)
    w2, b2 = init_params(kp2, H2, V2)
    out2 = masked_category_forward(x2, w2, b2)
    jax.block_until_ready(out2)
    ref2 = jax.nn.log_softmax(x2 @ w2.T + b2, axis=-1)
    assert out2.shape == (B2, S2, V2)
    assert jnp.allclose(out2, ref2, atol=1e-4, rtol=1e-4)

    # NOTE: despite the class name, the PyTorch forward applies no mask
    # (just Linear + LogSoftmax), so none is applied here either.
    print("KERNEL_OK")
</pallas_src>

<mosaic_0001>
module attributes {stable_mosaic.version = 11 : i64} {
  func.func @_logprob_kernel(%arg0: i32, %arg1: i32, %arg2: memref<16x32xf32, #tpu.memory_space<vmem>>, %arg3: memref<128x32xf32, #tpu.memory_space<vmem>>, %arg4: memref<1x128xf32, #tpu.memory_space<vmem>>, %arg5: memref<16x1xf32, #tpu.memory_space<vmem>>, %arg6: memref<16x128xf32, #tpu.memory_space<vmem>>) attributes {dimension_semantics = [#tpu.dimension_semantics<parallel>, #tpu.dimension_semantics<arbitrary>], iteration_bounds = array<i64: 1, 1>, scalar_prefetch = 0 : i64, scratch_operands = 0 : i64, tpu.core_type = #tpu.core_type<tc>, window_params = [{transform_indices = @transform_0, window_bounds = array<i64: 16, 32>}, {transform_indices = @transform_1, window_bounds = array<i64: 128, 32>}, {transform_indices = @transform_2, window_bounds = array<i64: 1, 128>}, {transform_indices = @transform_3, window_bounds = array<i64: 16, 1>}, {transform_indices = @transform_4, window_bounds = array<i64: 16, 128>}]} {
    %c0 = arith.constant 0 : index
    %c0_0 = arith.constant 0 : index
    %0 = vector.load %arg2[%c0, %c0_0] : memref<16x32xf32, #tpu.memory_space<vmem>>, vector<16x32xf32>
    %c0_1 = arith.constant 0 : index
    %c0_2 = arith.constant 0 : index
    %1 = vector.load %arg3[%c0_1, %c0_2] : memref<128x32xf32, #tpu.memory_space<vmem>>, vector<128x32xf32>
    %cst = arith.constant dense<0.000000e+00> : vector<16x128xf32>
    %2 = tpu.matmul %0, %1, %cst {dimension_numbers = #tpu.dot_dimension_numbers<[1], [1], [0], [0], [0, 0, 1, 0], [], []>} : vector<16x32xf32>, vector<128x32xf32>, vector<16x128xf32> -> vector<16x128xf32>
    %c0_3 = arith.constant 0 : index
    %c0_4 = arith.constant 0 : index
    %3 = vector.load %arg4[%c0_3, %c0_4] : memref<1x128xf32, #tpu.memory_space<vmem>>, vector<1x128xf32>
    %4 = vector.broadcast %3 : vector<1x128xf32> to vector<16x128xf32>
    %5 = arith.addf %2, %4 : vector<16x128xf32>
    %c0_5 = arith.constant 0 : index
    %c0_6 = arith.constant 0 : index
    %6 = vector.load %arg5[%c0_5, %c0_6] : memref<16x1xf32, #tpu.memory_space<vmem>>, vector<16x1xf32>
    %7 = vector.broadcast %6 : vector<16x1xf32> to vector<16x128xf32>
    %8 = arith.subf %5, %7 : vector<16x128xf32>
    %c0_7 = arith.constant 0 : index
    %c0_8 = arith.constant 0 : index
    %9 = vector.load %arg6[%c0_7, %c0_8] : memref<16x128xf32, #tpu.memory_space<vmem>>, vector<16x128xf32>
    tpu.vector_store %arg6[%c0_7, %c0_8], %8 {strides = array<i32>} : memref<16x128xf32, #tpu.memory_space<vmem>>, vector<16x128xf32>,
    return
  }
  func.func @transform_0(%arg0: i32, %arg1: i32) -> (i32, i32) {
    %c0_i32 = arith.constant 0 : i32
    %c0_i32_0 = arith.constant 0 : i32
    return %arg0, %c0_i32 : i32, i32
  }
  func.func @transform_1(%arg0: i32, %arg1: i32) -> (i32, i32) {
    %c0_i32 = arith.constant 0 : i32
    %c0_i32_0 = arith.constant 0 : i32
    return %arg1, %c0_i32 : i32, i32
  }
  func.func @transform_2(%arg0: i32, %arg1: i32) -> (i32, i32) {
    %c0_i32 = arith.constant 0 : i32
    %c0_i32_0 = arith.constant 0 : i32
    return %c0_i32, %arg1 : i32, i32
  }
  func.func @transform_3(%arg0: i32, %arg1: i32) -> (i32, i32) {
    %c0_i32 = arith.constant 0 : i32
    %c0_i32_0 = arith.constant 0 : i32
    return %arg0, %c0_i32 : i32, i32
  }
  func.func @transform_4(%arg0: i32, %arg1: i32) -> (i32, i32) {
    %c0_i32 = arith.constant 0 : i32
    return %arg0, %arg1 : i32, i32
  }
}

module attributes {stable_mosaic.version = 11 : i64} {
  func.func @_lse_kernel(%arg0: i32, %arg1: i32, %arg2: memref<16x32xf32, #tpu.memory_space<vmem>>, %arg3: memref<128x32xf32, #tpu.memory_space<vmem>>, %arg4: memref<1x128xf32, #tpu.memory_space<vmem>>, %arg5: memref<16x1xf32, #tpu.memory_space<vmem>>, %arg6: memref<16x1xf32, #tpu.memory_space<vmem>>, %arg7: memref<16x1xf32, #tpu.memory_space<vmem>>) attributes {dimension_semantics = [#tpu.dimension_semantics<parallel>, #tpu.dimension_semantics<arbitrary>], iteration_bounds = array<i64: 1, 1>, scalar_prefetch = 0 : i64, scratch_operands = 2 : i64, tpu.core_type = #tpu.core_type<tc>, window_params = [{transform_indices = @transform_0, window_bounds = array<i64: 16, 32>}, {transform_indices = @transform_1, window_bounds = array<i64: 128, 32>}, {transform_indices = @transform_2, window_bounds = array<i64: 1, 128>}, {transform_indices = @transform_3, window_bounds = array<i64: 16, 1>}]} {
    %c0_i32 = arith.constant 0 : i32
    %0 = arith.cmpi eq, %arg1, %c0_i32 : i32
    %1 = arith.extui %0 : i1 to i32
    %c0_i32_0 = arith.constant 0 : i32
    %2 = arith.cmpi ne, %1, %c0_i32_0 : i32
    scf.if %2 {
      %cst_18 = arith.constant 0xFF800000 : f32
      %28 = vector.broadcast %cst_18 : f32 to vector<16x1xf32>
      %c0_19 = arith.constant 0 : index
      %c0_20 = arith.constant 0 : index
      %29 = vector.load %arg6[%c0_19, %c0_20] : memref<16x1xf32, #tpu.memory_space<vmem>>, vector<16x1xf32>
      tpu.vector_store %arg6[%c0_19, %c0_20], %28 {strides = array<i32>} : memref<16x1xf32, #tpu.memory_space<vmem>>, vector<16x1xf32>,
      %cst_21 = arith.constant 0.000000e+00 : f32
      %30 = vector.broadcast %cst_21 : f32 to vector<16x1xf32>
      %c0_22 = arith.constant 0 : index
      %c0_23 = arith.constant 0 : index
      %31 = vector.load %arg7[%c0_22, %c0_23] : memref<16x1xf32, #tpu.memory_space<vmem>>, vector<16x1xf32>
      tpu.vector_store %arg7[%c0_22, %c0_23], %30 {strides = array<i32>} : memref<16x1xf32, #tpu.memory_space<vmem>>, vector<16x1xf32>,
    } else {
    }
    %c0 = arith.constant 0 : index
    %c0_1 = arith.constant 0 : index
    %3 = vector.load %arg2[%c0, %c0_1] : memref<16x32xf32, #tpu.memory_space<vmem>>, vector<16x32xf32>
    %c0_2 = arith.constant 0 : index
    %c0_3 = arith.constant 0 : index
    %4 = vector.load %arg3[%c0_2, %c0_3] : memref<128x32xf32, #tpu.memory_space<vmem>>, vector<128x32xf32>
    %cst = arith.constant dense<0.000000e+00> : vector<16x128xf32>
    %5 = tpu.matmul %3, %4, %cst {dimension_numbers = #tpu.dot_dimension_numbers<[1], [1], [0], [0], [0, 0, 1, 0], [], []>} : vector<16x32xf32>, vector<128x32xf32>, vector<16x128xf32> -> vector<16x128xf32>
    %c0_4 = arith.constant 0 : index
    %c0_5 = arith.constant 0 : index
    %6 = vector.load %arg4[%c0_4, %c0_5] : memref<1x128xf32, #tpu.memory_space<vmem>>, vector<1x128xf32>
    %7 = vector.broadcast %6 : vector<1x128xf32> to vector<16x128xf32>
    %8 = arith.addf %5, %7 : vector<16x128xf32>
    %c0_6 = arith.constant 0 : index
    %c0_7 = arith.constant 0 : index
    %9 = vector.load %arg6[%c0_6, %c0_7] : memref<16x1xf32, #tpu.memory_space<vmem>>, vector<16x1xf32>
    %cst_8 = arith.constant dense<0xFF800000> : vector<16xf32>
    %10 = vector.multi_reduction <maximumf>, %8, %cst_8 [1] : vector<16x128xf32> to vector<16xf32>
    %11 = vector.shape_cast %10 : vector<16xf32> to vector<16x1xf32>
    %12 = arith.maximumf %9, %11 : vector<16x1xf32>
    %13 = arith.subf %9, %12 : vector<16x1xf32>
    %14 = math.exp %13 : vector<16x1xf32>
    %c0_9 = arith.constant 0 : index
    %c0_10 = arith.constant 0 : index
    %15 = vector.load %arg7[%c0_9, %c0_10] : memref<16x1xf32, #tpu.memory_space<vmem>>, vector<16x1xf32>
    %16 = arith.mulf %14, %15 : vector<16x1xf32>
    %17 = vector.broadcast %12 : vector<16x1xf32> to vector<16x128xf32>
    %18 = arith.subf %8, %17 : vector<16x128xf32>
    %19 = math.exp %18 : vector<16x128xf32>
    %cst_11 = arith.constant dense<0.000000e+00> : vector<16xf32>
    %20 = vector.multi_reduction <add>, %19, %cst_11 [1] : vector<16x128xf32> to vector<16xf32>
    %21 = vector.shape_cast %20 : vector<16xf32> to vector<16x1xf32>
    %22 = arith.addf %16, %21 : vector<16x1xf32>
    %c0_12 = arith.constant 0 : index
    %c0_13 = arith.constant 0 : index
    %23 = vector.load %arg7[%c0_12, %c0_13] : memref<16x1xf32, #tpu.memory_space<vmem>>, vector<16x1xf32>
    tpu.vector_store %arg7[%c0_12, %c0_13], %22 {strides = array<i32>} : memref<16x1xf32, #tpu.memory_space<vmem>>, vector<16x1xf32>,
    %c0_14 = arith.constant 0 : index
    %c0_15 = arith.constant 0 : index
    %24 = vector.load %arg6[%c0_14, %c0_15] : memref<16x1xf32, #tpu.memory_space<vmem>>, vector<16x1xf32>
    tpu.vector_store %arg6[%c0_14, %c0_15], %12 {strides = array<i32>} : memref<16x1xf32, #tpu.memory_space<vmem>>, vector<16x1xf32>,
    %c0_i32_16 = arith.constant 0 : i32
    %25 = arith.cmpi eq, %arg1, %c0_i32_16 : i32
    %26 = arith.extui %25 : i1 to i32
    %c0_i32_17 = arith.constant 0 : i32
    %27 = arith.cmpi ne, %26, %c0_i32_17 : i32
    scf.if %27 {
      %c0_18 = arith.constant 0 : index
      %c0_19 = arith.constant 0 : index
      %28 = vector.load %arg6[%c0_18, %c0_19] : memref<16x1xf32, #tpu.memory_space<vmem>>, vector<16x1xf32>
      %c0_20 = arith.constant 0 : index
      %c0_21 = arith.constant 0 : index
      %29 = vector.load %arg7[%c0_20, %c0_21] : memref<16x1xf32, #tpu.memory_space<vmem>>, vector<16x1xf32>
      %30 = math.log %29 : vector<16x1xf32>
      %31 = arith.addf %28, %30 : vector<16x1xf32>
      %c0_22 = arith.constant 0 : index
      %c0_23 = arith.constant 0 : index
      %32 = vector.load %arg5[%c0_22, %c0_23] : memref<16x1xf32, #tpu.memory_space<vmem>>, vector<16x1xf32>
      tpu.vector_store %arg5[%c0_22, %c0_23], %31 {strides = array<i32>} : memref<16x1xf32, #tpu.memory_space<vmem>>, vector<16x1xf32>,
    } else {
    }
    return
  }
  func.func @transform_0(%arg0: i32, %arg1: i32) -> (i32, i32) {
    %c0_i32 = arith.constant 0 : i32
    %c0_i32_0 = arith.constant 0 : i32
    return %arg0, %c0_i32 : i32, i32
  }
  func.func @transform_1(%arg0: i32, %arg1: i32) -> (i32, i32) {
    %c0_i32 = arith.constant 0 : i32
    %c0_i32_0 = arith.constant 0 : i32
    return %arg1, %c0_i32 : i32, i32
  }
  func.func @transform_2(%arg0: i32, %arg1: i32) -> (i32, i32) {
    %c0_i32 = arith.constant 0 : i32
    %c0_i32_0 = arith.constant 0 : i32
    return %c0_i32, %arg1 : i32, i32
  }
  func.func @transform_3(%arg0: i32, %arg1: i32) -> (i32, i32) {
    %c0_i32 = arith.constant 0 : i32
    %c0_i32_0 = arith.constant 0 : i32
    return %arg0, %c0_i32 : i32, i32
  }
}

</mosaic_0001>

<llo_original>
// kernel: masked_category_forward.3
$region0: #{masked_category_forward.3}
  #allocation0 [shape = 'u32[]', space=smem, size = 0x4, offset = 0x4, fixed_abs, tag = 'smem constant byte address 0x4 - core index']
  #allocation1 [shape = 'u32[72,128]{1,0:T(1,128)}', space=vmem, size = 0x9000, scoped, tag = 'internal scratch']
  %s0 = inlined_call_operand.vmem [shape: f32[16,32], index: 0, kind: input, shape index: {}]
  %s1 = inlined_call_operand.vmem [shape: f32[128,32], index: 1, kind: input, shape index: {}]
  %s2 = inlined_call_operand.vmem [shape: f32[1,128], index: 2, kind: input, shape index: {}]
  %s3 = inlined_call_operand.vmem [shape: f32[16,1], index: 3, kind: input, shape index: {}]
  %s4 = inlined_call_operand.hbm [shape: f32[16,128], index: 4, kind: output, shape index: {}]
  %s5 = sld [smem:[#allocation0]]
  $region26: #{masked_category_forward.3} parent=0
    _
  %s7 = ssub.s32 1, %s5
  %s8 = scalar_select 0, %s7, %s5
  $region1: #{masked_category_forward.3} parent=0
    #allocation2 [shape = 'u8[8192]{0}', space=vmem, size = 0x2000, scoped, tag = 'output window, operand 0, single buffered']
    #allocation3 [shape = 's32[1]{0}', space=sflag, size = 0x4, scoped, tag = 'scoped memory for masked_category_forward.3']
    %9 = vsyncpa [#allocation3], 0
    // Predicated region
    $region2: #{masked_category_forward.3} parent=1 // pred_check
      _
    $region3: #{masked_category_forward.3} parent=1 // pred_check_branch
      %11 = sbr.rel (0) target = $region5
    $region4: #{masked_category_forward.3} parent=1 // pred_region
      _
    $region5: #{masked_category_forward.3} parent=1 // pred_fallthru
      _
    // Predicated region
    $region6: #{masked_category_forward.3} parent=1 // pred_check
      _
    $region7: #{masked_category_forward.3} parent=1 // pred_check_branch
      %13 = sbr.rel (0) target = $region9
    $region8: #{masked_category_forward.3} parent=1 // pred_region
      _
    $region9: #{masked_category_forward.3} parent=1 // pred_fallthru
      _
    // Predicated region
    $region10: #{masked_category_forward.3} parent=1 // pred_check
      _
    $region11: #{masked_category_forward.3} parent=1 // pred_check_branch
      %15 = sbr.rel (0) target = $region13
    $region12: #{masked_category_forward.3} parent=1 // pred_region
      _
    $region13: #{masked_category_forward.3} parent=1 // pred_fallthru
      _
    // Predicated region
    $region14: #{masked_category_forward.3} parent=1 // pred_check
      _
    $region15: #{masked_category_forward.3} parent=1 // pred_check_branch
      %17 = sbr.rel (0) target = $region17
    $region16: #{masked_category_forward.3} parent=1 // pred_region
      _
    $region17: #{masked_category_forward.3} parent=1 // pred_fallthru
      _
    %v18 = vld [vmem:[%s0] sm:$0xff]
    %v19 = vld [vmem:[%s0 + $0x8] sm:$0xff]
    %v20 = vld [vmem:[%s1] sm:$0xff]
    %v21 = vld [vmem:[%s1 + $0x8] sm:$0xff]
    %v22 = vld [vmem:[%s1 + $0x10] sm:$0xff]
    %v23 = vld [vmem:[%s1 + $0x18] sm:$0xff]
    %v24 = vld [vmem:[%s1 + $0x20] sm:$0xff]
    %v25 = vld [vmem:[%s1 + $0x28] sm:$0xff]
    %v26 = vld [vmem:[%s1 + $0x30] sm:$0xff]
    %v27 = vld [vmem:[%s1 + $0x38] sm:$0xff]
    %v28 = vld [vmem:[%s1 + $0x40] sm:$0xff]
    %v29 = vld [vmem:[%s1 + $0x48] sm:$0xff]
    %v30 = vld [vmem:[%s1 + $0x50] sm:$0xff]
    %v31 = vld [vmem:[%s1 + $0x58] sm:$0xff]
    %v32 = vld [vmem:[%s1 + $0x60] sm:$0xff]
    %v33 = vld [vmem:[%s1 + $0x68] sm:$0xff]
    %v34 = vld [vmem:[%s1 + $0x70] sm:$0xff]
    %v35 = vld [vmem:[%s1 + $0x78] sm:$0xff]
    %v36 = vld [vmem:[%s2] sm:$0x1]
    %v38 = vperm.slane %v36, 0
    %vm40 = vcmask 261120
    %v42 = vsel %vm40, %v18, 0
    %v45 = vsel %vm40, %v19, 0
    %v48 = vsel %vm40, %v20, 0
    %v51 = vsel %vm40, %v21, 0
    %v54 = vsel %vm40, %v22, 0
    %v57 = vsel %vm40, %v23, 0
    %v60 = vsel %vm40, %v24, 0
    %v63 = vsel %vm40, %v25, 0
    %v66 = vsel %vm40, %v26, 0
    %v69 = vsel %vm40, %v27, 0
    %v72 = vsel %vm40, %v28, 0
    %v75 = vsel %vm40, %v29, 0
    %v78 = vsel %vm40, %v30, 0
    %v81 = vsel %vm40, %v31, 0
    %v84 = vsel %vm40, %v32, 0
    %v87 = vsel %vm40, %v33, 0
    %v90 = vsel %vm40, %v34, 0
    %v93 = vsel %vm40, %v35, 0
    %95 = vmatpush.xpose.msra.mxu0 %v93
    %96 = vmatpush.xpose.msra.mxu0 %v90
    %97 = vmatpush.xpose.msra.mxu0 %v87
    %98 = vmatpush.xpose.msra.mxu0 %v84
    %99 = vmatpush.xpose.msra.mxu0 %v81
    %100 = vmatpush.xpose.msra.mxu0 %v78
    %101 = vmatpush.xpose.msra.mxu0 %v75
    %102 = vmatpush.xpose.msra.mxu0 %v72
    %103 = vmatpush.xpose.msra.mxu0 %v69
    %104 = vmatpush.xpose.msra.mxu0 %v66
    %105 = vmatpush.xpose.msra.mxu0 %v63
    %106 = vmatpush.xpose.msra.mxu0 %v60
    %107 = vmatpush.xpose.msra.mxu0 %v57
    %108 = vmatpush.xpose.msra.mxu0 %v54
    %109 = vmatpush.xpose.msra.mxu0 %v51
    %110 = vmatpush.xpose.msra.mxu0 %v48
    %111 = vmatmul.f32.gmra.mxu0 %v42
    %v112 = vpop.f32.mrf.mxu0
    %v113 = vadd.f32 %v38, %v112
    %114 = vmatmul.f32.gmra.mxu0 %v45
    %v115 = vpop.f32.mrf.mxu0
    %v116 = vadd.f32 %v38, %v115
    %117 = vdwg.mxu0
    %v118 = vld [vmem:[%s3] sm:$0xff]
    %v119 = vld [vmem:[%s3 + $0x8] sm:$0xff]
    %121 = vset.pattern.permute.xlu0 0
    %122 = vperm.xlu0 %121, %v118
    %v123 = vpop.permute.xlu0 %122
    %126 = vset.pattern.permute.xlu0 0
    %127 = vperm.xlu0 %126, %v119
    %v128 = vpop.permute.xlu0 %127
    %v130 = vsub.f32 %v113, %v123
    %v131 = vsub.f32 %v116, %v128
    %132 = vst [vmem:[#allocation2] sm:$0xff] %v130
    %133 = vst [vmem:[#allocation2 + $0x8] sm:$0xff] %v131
    // Predicated region
    $region18: #{masked_category_forward.3} parent=1 // pred_check
      _
    $region19: #{masked_category_forward.3} parent=1 // pred_check_branch
      %135 = sbr.rel (0) target = $region21
    $region20: #{masked_category_forward.3} parent=1 // pred_region
      %137 = vsyncadd [#allocation3], 0
      %s138 = sshll.u32 [#allocation2], 4
      %s139 = int_to_ptr.vmem [resolvable:$true] %s138
      %s140 = sshll.u32 %s4, 4
      %s141 = int_to_ptr.hbm [resolvable:$true] %s140
      %146 = dma.vmem_to_hbm [thread:$0]  %s139, 256, %s141, [#allocation3], 128, 128, 8
    $region21: #{masked_category_forward.3} parent=1 // pred_fallthru
      _
    // Predicated region
    $region22: #{masked_category_forward.3} parent=1 // pred_check
      _
    $region23: #{masked_category_forward.3} parent=1 // pred_check_branch
      %148 = sbr.rel (0) target = $region25
    $region24: #{masked_category_forward.3} parent=1 // pred_region
      %150 = dma.done [#allocation3], 256
    $region25: #{masked_category_forward.3} parent=1 // pred_fallthru
      _
    %151 = vsyncpa [#allocation3], 1

// kernel: masked_category_forward.2
$region0: #{masked_category_forward.2}
  #allocation0 [shape = 'u32[]', space=smem, size = 0x4, offset = 0x4, fixed_abs, tag = 'smem constant byte address 0x4 - core index']
  #allocation1 [shape = 'u32[72,128]{1,0:T(1,128)}', space=vmem, size = 0x9000, scoped, tag = 'internal scratch']
  #allocation2 [shape = 'f32[16,1]{1,0:T(8,128)}', space=vmem, size = 0x2000, scoped, tag = 'scratch operand']
  #allocation3 [shape = 'f32[16,1]{1,0:T(8,128)}', space=vmem, size = 0x2000, scoped, tag = 'scratch operand']
  %s0 = inlined_call_operand.vmem [shape: f32[16,32], index: 0, kind: input, shape index: {}]
  %s1 = inlined_call_operand.vmem [shape: f32[128,32], index: 1, kind: input, shape index: {}]
  %s2 = inlined_call_operand.vmem [shape: f32[1,128], index: 2, kind: input, shape index: {}]
  %s3 = inlined_call_operand.vmem [shape: f32[16,1], index: 3, kind: output, shape index: {}]
  %s4 = sld [smem:[#allocation0]]
  $region30: #{masked_category_forward.2} parent=0
    _
  %s6 = ssub.s32 1, %s4
  %s7 = scalar_select 0, %s6, %s4
  // Predicated region
  $region2: #{masked_category_forward.2} parent=0 // pred_check
    _
  $region3: #{masked_category_forward.2} parent=0 // pred_check_branch
    %9 = sbr.rel (0) target = $region5
  $region4: #{masked_category_forward.2} parent=0 // pred_region
    _
  $region5: #{masked_category_forward.2} parent=0 // pred_fallthru
    _
  // Predicated region
  $region6: #{masked_category_forward.2} parent=0 // pred_check
    _
  $region7: #{masked_category_forward.2} parent=0 // pred_check_branch
    %11 = sbr.rel (0) target = $region9
  $region8: #{masked_category_forward.2} parent=0 // pred_region
    _
  $region9: #{masked_category_forward.2} parent=0 // pred_fallthru
    _
  // Predicated region
  $region10: #{masked_category_forward.2} parent=0 // pred_check
    _
  $region11: #{masked_category_forward.2} parent=0 // pred_check_branch
    %13 = sbr.rel (0) target = $region13
  $region12: #{masked_category_forward.2} parent=0 // pred_region
    _
  $region13: #{masked_category_forward.2} parent=0 // pred_fallthru
    _
  %p14 = scmp.eq.s32.totalorder 0, 0
  // Predicated region
  $region14: #{masked_category_forward.2} parent=0 // pred_check
    %p15 = pneg %p14
  $region15: #{masked_category_forward.2} parent=0 // pred_check_branch
    %17 = sbr.rel (%p15) target = $region17
  $region16: #{masked_category_forward.2} parent=0 // pred_region
    %vm18 = vcmask 7168
    %19 = vst.msk [vmem:[#allocation2] sm:$0xff] %vm18, -inf
    %20 = vst.msk [vmem:[#allocation2 + $0x8] sm:$0xff] %vm18, -inf
    %21 = vst.msk [vmem:[#allocation3] sm:$0xff] %vm18, 0.0
    %22 = vst.msk [vmem:[#allocation3 + $0x8] sm:$0xff] %vm18, 0.0
  $region17: #{masked_category_forward.2} parent=0 // pred_fallthru
    _
  %v23 = vld [vmem:[%s0] sm:$0xff]
  %v24 = vld [vmem:[%s0 + $0x8] sm:$0xff]
  %v25 = vld [vmem:[%s1] sm:$0xff]
  %v26 = vld [vmem:[%s1 + $0x8] sm:$0xff]
  %v27 = vld [vmem:[%s1 + $0x10] sm:$0xff]
  %v28 = vld [vmem:[%s1 + $0x18] sm:$0xff]
  %v29 = vld [vmem:[%s1 + $0x20] sm:$0xff]
  %v30 = vld [vmem:[%s1 + $0x28] sm:$0xff]
  %v31 = vld [vmem:[%s1 + $0x30] sm:$0xff]
  %v32 = vld [vmem:[%s1 + $0x38] sm:$0xff]
  %v33 = vld [vmem:[%s1 + $0x40] sm:$0xff]
  %v34 = vld [vmem:[%s1 + $0x48] sm:$0xff]
  %v35 = vld [vmem:[%s1 + $0x50] sm:$0xff]
  %v36 = vld [vmem:[%s1 + $0x58] sm:$0xff]
  %v37 = vld [vmem:[%s1 + $0x60] sm:$0xff]
  %v38 = vld [vmem:[%s1 + $0x68] sm:$0xff]
  %v39 = vld [vmem:[%s1 + $0x70] sm:$0xff]
  %v40 = vld [vmem:[%s1 + $0x78] sm:$0xff]
  %v41 = vld [vmem:[%s2] sm:$0x1]
  %v43 = vperm.slane %v41, 0
  %vm45 = vcmask 261120
  %v47 = vsel %vm45, %v23, 0
  %v50 = vsel %vm45, %v24, 0
  %v53 = vsel %vm45, %v25, 0
  %v56 = vsel %vm45, %v26, 0
  %v59 = vsel %vm45, %v27, 0
  %v62 = vsel %vm45, %v28, 0
  %v65 = vsel %vm45, %v29, 0
  %v68 = vsel %vm45, %v30, 0
  %v71 = vsel %vm45, %v31, 0
  %v74 = vsel %vm45, %v32, 0
  %v77 = vsel %vm45, %v33, 0
  %v80 = vsel %vm45, %v34, 0
  %v83 = vsel %vm45, %v35, 0
  %v86 = vsel %vm45, %v36, 0
  %v89 = vsel %vm45, %v37, 0
  %v92 = vsel %vm45, %v38, 0
  %v95 = vsel %vm45, %v39, 0
  %v98 = vsel %vm45, %v40, 0
  %100 = vmatpush.xpose.msra.mxu0 %v98
  %101 = vmatpush.xpose.msra.mxu0 %v95
  %102 = vmatpush.xpose.msra.mxu0 %v92
  %103 = vmatpush.xpose.msra.mxu0 %v89
  %104 = vmatpush.xpose.msra.mxu0 %v86
  %105 = vmatpush.xpose.msra.mxu0 %v83
  %106 = vmatpush.xpose.msra.mxu0 %v80
  %107 = vmatpush.xpose.msra.mxu0 %v77
  %108 = vmatpush.xpose.msra.mxu0 %v74
  %109 = vmatpush.xpose.msra.mxu0 %v71
  %110 = vmatpush.xpose.msra.mxu0 %v68
  %111 = vmatpush.xpose.msra.mxu0 %v65
  %112 = vmatpush.xpose.msra.mxu0 %v62
  %113 = vmatpush.xpose.msra.mxu0 %v59
  %114 = vmatpush.xpose.msra.mxu0 %v56
  %115 = vmatpush.xpose.msra.mxu0 %v53
  %116 = vmatmul.f32.gmra.mxu0 %v47
  %v117 = vpop.f32.mrf.mxu0
  %v118 = vadd.f32 %v43, %v117
  %119 = vmatmul.f32.gmra.mxu0 %v50
  %v120 = vpop.f32.mrf.mxu0
  %v121 = vadd.f32 %v43, %v120
  %122 = vdwg.mxu0
  %v123 = vld [vmem:[#allocation2] sm:$0xff]
  %v124 = vld [vmem:[#allocation2 + $0x8] sm:$0xff]
  %125 = vmax.xlane.f32.xlu0 %v118
  %v126 = vpop.xlane.xlu0 %125
  %127 = vmax.xlane.f32.xlu0 %v121
  %v128 = vpop.xlane.xlu0 %127
  %v129 = vmax.f32 %v123, %v126
  %v130 = vmax.f32 %v124, %v128
  %v131 = vsub.f32 %v123, %v129
  %v132 = vsub.f32 %v124, %v130
  %v133 = vmul.f32 %v131, 1.442695
  %v134 = vpow.pop %v133
  %v135 = vmul.f32 %v132, 1.442695
  %v136 = vpow.pop %v135
  %v137 = vld [vmem:[#allocation3] sm:$0xff]
  %v138 = vld [vmem:[#allocation3 + $0x8] sm:$0xff]
  %v139 = vmul.f32 %v134, %v137
  %v140 = vmul.f32 %v136, %v138
  %142 = vset.pattern.permute.xlu0 0
  %143 = vperm.xlu0 %142, %v129
  %v144 = vpop.permute.xlu0 %143
  %147 = vset.pattern.permute.xlu0 0
  %148 = vperm.xlu0 %147, %v130
  %v149 = vpop.permute.xlu0 %148
  %v151 = vsub.f32 %v118, %v144
  %v152 = vsub.f32 %v121, %v149
  %v153 = vmul.f32 %v151, 1.442695
  %v154 = vpow.pop %v153
  %v155 = vmul.f32 %v152, 1.442695
  %v156 = vpow.pop %v155
  %157 = vadd.xlane.f32.xlu0 %v154
  %v158 = vpop.xlane.xlu0 %157
  %159 = vadd.xlane.f32.xlu0 %v156
  %v160 = vpop.xlane.xlu0 %159
  %v161 = vadd.f32 %v139, %v158
  %v162 = vadd.f32 %v140, %v160
  %vm163 = vcmask 7168
  %164 = vst.msk [vmem:[#allocation3] sm:$0xff] %vm163, %v161
  %165 = vst.msk [vmem:[#allocation3 + $0x8] sm:$0xff] %vm163, %v162
  %166 = vst.msk [vmem:[#allocation2] sm:$0xff] %vm163, %v129
  %167 = vst.msk [vmem:[#allocation2 + $0x8] sm:$0xff] %vm163, %v130
  // Predicated region
  $region18: #{masked_category_forward.2} parent=0 // pred_check
    %p168 = pneg %p14
  $region19: #{masked_category_forward.2} parent=0 // pred_check_branch
    %170 = sbr.rel (%p168) target = $region21
  $region20: #{masked_category_forward.2} parent=0 // pred_region
    %v171 = vld [vmem:[#allocation2] sm:$0xff]
    %v172 = vld [vmem:[#allocation2 + $0x8] sm:$0xff]
    %v173 = vld [vmem:[#allocation3] sm:$0xff]
    %v174 = vld [vmem:[#allocation3 + $0x8] sm:$0xff]
    %v175 = vlog2.pop %v173
    %v176 = vmul.f32 %v175, 0.6931472
    %v177 = vlog2.pop %v174
    %v178 = vmul.f32 %v177, 0.6931472
    %v179 = vadd.f32 %v171, %v176
    %v180 = vadd.f32 %v172, %v178
    %181 = vst.msk [vmem:[%s3] sm:$0xff] %vm163, %v179
    %182 = vst.msk [vmem:[%s3 + $0x8] sm:$0xff] %vm163, %v180
  $region21: #{masked_category_forward.2} parent=0 // pred_fallthru
    _
  // Predicated region
  $region22: #{masked_category_forward.2} parent=0 // pred_check
    _
  $region23: #{masked_category_forward.2} parent=0 // pred_check_branch
    %184 = sbr.rel (0) target = $region25
  $region24: #{masked_category_forward.2} parent=0 // pred_region
    _
  $region25: #{masked_category_forward.2} parent=0 // pred_fallthru
    _
  // Predicated region
  $region26: #{masked_category_forward.2} parent=0 // pred_check
    _
  $region27: #{masked_category_forward.2} parent=0 // pred_check_branch
    %186 = sbr.rel (0) target = $region29
  $region28: #{masked_category_forward.2} parent=0 // pred_region
    _
  $region29: #{masked_category_forward.2} parent=0 // pred_fallthru
    _

</llo_original>
